<compile_context>
chip_gen: v5e
topology: v5e:2x2
jax: 0.10.0
libtpu: 0.0.40
codegen_flags: <defaults>
</compile_context>

<pallas_src>
import jax
import jax.numpy as jnp
import numpy as np
from jax import lax
from jax.experimental import pallas as pl
from jax.experimental.pallas import tpu as pltpu

K = 5               # conv kernel size
PAD = (K - 1) // 2  # = 2, 'same' padding


def adp_smoother_kernel(m_ref, mask_ref, w_ref, o_ref, xm_ref, acc_ref):
    # m_ref, mask_ref: VMEM (Hp, L)   zero-padded, lane-interleaved slabs
    #                                 (L = N*C*Wp, plane p at lanes [p*Wp, (p+1)*Wp))
    # w_ref:           VMEM (K*K, Lout)  per-tap per-lane depthwise weights
    # o_ref:           VMEM (N, C, H, W) output, NCHW directly
    # xm_ref:          VMEM (Hp, L)   scratch: masked moving image slab
    # acc_ref:         VMEM (H, Lout) scratch: conv result slab
    Hp, L = m_ref.shape
    N, C, H, W = o_ref.shape
    Wp = W + 2 * PAD
    Lout = acc_ref.shape[1]        # = L - 2*PAD

    # 1) Mask multiply (module hot path): one lane-dense (Hp, L) multiply and a
    #    single aligned, full-extent store.  Halo rows/lanes stay zero because
    #    m's halo is zero (0 * anything = 0), so no memset is needed.
    xm_ref[...] = m_ref[...] * mask_ref[...]

    # 2) Depthwise 5x5 conv over all N*C planes at once.  Each tap:
    #    shifted *ref* load of the masked slab  x  per-lane weight row.
    #    One independent partial accumulator per kernel row (5 chains of 5 MACs
    #    instead of one 25-deep serial chain).
    partials = []
    for ky in range(K):
        t = ky * K
        acc = w_ref[t:t + 1, :] * xm_ref[ky:ky + H, 0:Lout]          # tap (ky, 0)
        for kx in range(1, K):
            acc = acc + w_ref[t + kx:t + kx + 1, :] * xm_ref[ky:ky + H, kx:kx + Lout]
        partials.append(acc)
    acc_ref[...] = ((partials[0] + partials[1]) +
                    (partials[2] + partials[3]) + partials[4])

    # 3) De-interleave straight to NCHW.  Slices come off the scratch ref (load
    #    path), not the accumulator value, so no value relayouts; the W-lane
    #    masked stores are cheap at this size and remove all wrapper output glue.
    for n in range(N):
        for c in range(C):
            col = (n * C + c) * Wp
            o_ref[n, c] = acc_ref[:, col:col + W].astype(o_ref.dtype)


def adp_smoother_forward(m, mask, weight):
    """m, mask: [N, C, H, W] float32; weight: [C, K, K] depthwise (groups=C)."""
    N, C, H, W = m.shape
    Hp, Wp = H + 2 * PAD, W + 2 * PAD
    NC = N * C
    L = NC * Wp                    # lane extent of the interleaved padded slab
    Lout = L - 2 * PAD             # lane extent of the conv-result slab

    # Layout plumbing (wrapper side, per review): zero-padded planes laid side
    # by side on the lane axis at stride Wp, plane p = n*C + c.
    def to_slab(x):
        xp = jnp.pad(x, ((0, 0), (0, 0), (PAD, PAD), (PAD, PAD)))   # (N,C,Hp,Wp)
        return xp.transpose(2, 0, 1, 3).reshape(Hp, L)              # (Hp, L)

    m_slab = to_slab(m.astype(jnp.float32))
    mask_slab = to_slab(mask.astype(jnp.float32))

    # Per-tap per-lane weight slab: w_slab[t, l] = weight[c(l // Wp), t//K, t%K].
    lane_chan = (jnp.arange(Lout) // Wp) % C                         # (Lout,)
    w_slab = weight.reshape(C, K * K).astype(jnp.float32)[lane_chan].T  # (K*K, Lout)

    return pl.pallas_call(
        adp_smoother_kernel,
        out_shape=jax.ShapeDtypeStruct((N, C, H, W), m.dtype),
        in_specs=[
            pl.BlockSpec(memory_space=pltpu.MemorySpace.VMEM),       # m slab
            pl.BlockSpec(memory_space=pltpu.MemorySpace.VMEM),       # mask slab
            pl.BlockSpec(memory_space=pltpu.MemorySpace.VMEM),       # weight slab
        ],
        out_specs=pl.BlockSpec(memory_space=pltpu.MemorySpace.VMEM),
        scratch_shapes=[
            pltpu.VMEM((Hp, L), jnp.float32),                        # masked slab
            pltpu.VMEM((H, Lout), jnp.float32),                      # conv result
        ],
    )(m_slab, mask_slab, w_slab)


if __name__ == "__main__":
    # Small shapes consistent with the module: dim=2 channels (Conv2d(2,2,...,groups=2)).
    N, C, H, W = 2, 2, 16, 16
    key = jax.random.PRNGKey(0)
    k_m, k_mask, k_w = jax.random.split(key, 3)

    # moving image m: [N, 2, H, W]
    m = jax.random.normal(k_m, (N, C, H, W), dtype=jnp.float32)

    # mask Parameter (ones at init in the module; perturbed so the multiply
    # path is exercised — it is a trained parameter at forward time).
    mask = 1.0 + 0.25 * jax.random.normal(k_mask, (N, C, H, W), dtype=jnp.float32)

    # Conv2d(2, 2, 5, groups=2, bias=False) weight, stored as [C, K, K].
    fan_in = 1 * K * K
    bound = 1.0 / np.sqrt(fan_in)
    weight = jax.random.uniform(k_w, (C, K, K), dtype=jnp.float32,
                                minval=-bound, maxval=bound)

    out = adp_smoother_forward(m, mask, weight)
    out = jax.block_until_ready(out)

    # Reference check (plain JAX grouped conv, NCHW / OIHW).
    ref = lax.conv_general_dilated(
        m * mask,
        weight.reshape(C, 1, K, K),
        window_strides=(1, 1),
        padding=((PAD, PAD), (PAD, PAD)),
        dimension_numbers=("NCHW", "OIHW", "NCHW"),
        feature_group_count=C,
    )
    np.testing.assert_allclose(np.asarray(out), np.asarray(ref),
                               rtol=1e-5, atol=1e-5)

    print("KERNEL_OK")
</pallas_src>

<mosaic_0001>
module attributes {stable_mosaic.version = 11 : i64} {
  func.func @adp_smoother_kernel(%arg0: memref<20x80xf32, #tpu.memory_space<vmem>>, %arg1: memref<20x80xf32, #tpu.memory_space<vmem>>, %arg2: memref<25x76xf32, #tpu.memory_space<vmem>>, %arg3: memref<2x2x16x16xf32, #tpu.memory_space<vmem>>, %arg4: memref<20x80xf32, #tpu.memory_space<vmem>>, %arg5: memref<16x76xf32, #tpu.memory_space<vmem>>) attributes {dimension_semantics = [], scalar_prefetch = 0 : i64, scratch_operands = 2 : i64, tpu.core_type = #tpu.core_type<tc>} {
    %c0 = arith.constant 0 : index
    %c0_0 = arith.constant 0 : index
    %0 = vector.load %arg0[%c0, %c0_0] : memref<20x80xf32, #tpu.memory_space<vmem>>, vector<20x80xf32>
    %c0_1 = arith.constant 0 : index
    %c0_2 = arith.constant 0 : index
    %1 = vector.load %arg1[%c0_1, %c0_2] : memref<20x80xf32, #tpu.memory_space<vmem>>, vector<20x80xf32>
    %2 = arith.mulf %0, %1 : vector<20x80xf32>
    %c0_3 = arith.constant 0 : index
    %c0_4 = arith.constant 0 : index
    %3 = vector.load %arg4[%c0_3, %c0_4] : memref<20x80xf32, #tpu.memory_space<vmem>>, vector<20x80xf32>
    tpu.vector_store %arg4[%c0_3, %c0_4], %2 {strides = array<i32>} : memref<20x80xf32, #tpu.memory_space<vmem>>, vector<20x80xf32>,
    %c0_5 = arith.constant 0 : index
    %c0_6 = arith.constant 0 : index
    %4 = vector.load %arg2[%c0_5, %c0_6] : memref<25x76xf32, #tpu.memory_space<vmem>>, vector<1x76xf32>
    %c0_7 = arith.constant 0 : index
    %c0_8 = arith.constant 0 : index
    %5 = vector.load %arg4[%c0_7, %c0_8] : memref<20x80xf32, #tpu.memory_space<vmem>>, vector<16x76xf32>
    %6 = vector.broadcast %4 : vector<1x76xf32> to vector<16x76xf32>
    %7 = arith.mulf %6, %5 : vector<16x76xf32>
    %c1 = arith.constant 1 : index
    %c0_9 = arith.constant 0 : index
    %8 = vector.load %arg2[%c1, %c0_9] : memref<25x76xf32, #tpu.memory_space<vmem>>, vector<1x76xf32>
    %c0_10 = arith.constant 0 : index
    %c1_11 = arith.constant 1 : index
    %9 = vector.load %arg4[%c0_10, %c1_11] : memref<20x80xf32, #tpu.memory_space<vmem>>, vector<16x76xf32>
    %10 = vector.broadcast %8 : vector<1x76xf32> to vector<16x76xf32>
    %11 = arith.mulf %10, %9 : vector<16x76xf32>
    %12 = arith.addf %7, %11 : vector<16x76xf32>
    %c2 = arith.constant 2 : index
    %c0_12 = arith.constant 0 : index
    %13 = vector.load %arg2[%c2, %c0_12] : memref<25x76xf32, #tpu.memory_space<vmem>>, vector<1x76xf32>
    %c0_13 = arith.constant 0 : index
    %c2_14 = arith.constant 2 : index
    %14 = vector.load %arg4[%c0_13, %c2_14] : memref<20x80xf32, #tpu.memory_space<vmem>>, vector<16x76xf32>
    %15 = vector.broadcast %13 : vector<1x76xf32> to vector<16x76xf32>
    %16 = arith.mulf %15, %14 : vector<16x76xf32>
    %17 = arith.addf %12, %16 : vector<16x76xf32>
    %c3 = arith.constant 3 : index
    %c0_15 = arith.constant 0 : index
    %18 = vector.load %arg2[%c3, %c0_15] : memref<25x76xf32, #tpu.memory_space<vmem>>, vector<1x76xf32>
    %c0_16 = arith.constant 0 : index
    %c3_17 = arith.constant 3 : index
    %19 = vector.load %arg4[%c0_16, %c3_17] : memref<20x80xf32, #tpu.memory_space<vmem>>, vector<16x76xf32>
    %20 = vector.broadcast %18 : vector<1x76xf32> to vector<16x76xf32>
    %21 = arith.mulf %20, %19 : vector<16x76xf32>
    %22 = arith.addf %17, %21 : vector<16x76xf32>
    %c4 = arith.constant 4 : index
    %c0_18 = arith.constant 0 : index
    %23 = vector.load %arg2[%c4, %c0_18] : memref<25x76xf32, #tpu.memory_space<vmem>>, vector<1x76xf32>
    %c0_19 = arith.constant 0 : index
    %c4_20 = arith.constant 4 : index
    %24 = vector.load %arg4[%c0_19, %c4_20] : memref<20x80xf32, #tpu.memory_space<vmem>>, vector<16x76xf32>
    %25 = vector.broadcast %23 : vector<1x76xf32> to vector<16x76xf32>
    %26 = arith.mulf %25, %24 : vector<16x76xf32>
    %27 = arith.addf %22, %26 : vector<16x76xf32>
    %c5 = arith.constant 5 : index
    %c0_21 = arith.constant 0 : index
    %28 = vector.load %arg2[%c5, %c0_21] : memref<25x76xf32, #tpu.memory_space<vmem>>, vector<1x76xf32>
    %c1_22 = arith.constant 1 : index
    %c0_23 = arith.constant 0 : index
    %29 = vector.load %arg4[%c1_22, %c0_23] : memref<20x80xf32, #tpu.memory_space<vmem>>, vector<16x76xf32>
    %30 = vector.broadcast %28 : vector<1x76xf32> to vector<16x76xf32>
    %31 = arith.mulf %30, %29 : vector<16x76xf32>
    %c6 = arith.constant 6 : index
    %c0_24 = arith.constant 0 : index
    %32 = vector.load %arg2[%c6, %c0_24] : memref<25x76xf32, #tpu.memory_space<vmem>>, vector<1x76xf32>
    %c1_25 = arith.constant 1 : index
    %c1_26 = arith.constant 1 : index
    %33 = vector.load %arg4[%c1_25, %c1_26] : memref<20x80xf32, #tpu.memory_space<vmem>>, vector<16x76xf32>
    %34 = vector.broadcast %32 : vector<1x76xf32> to vector<16x76xf32>
    %35 = arith.mulf %34, %33 : vector<16x76xf32>
    %36 = arith.addf %31, %35 : vector<16x76xf32>
    %c7 = arith.constant 7 : index
    %c0_27 = arith.constant 0 : index
    %37 = vector.load %arg2[%c7, %c0_27] : memref<25x76xf32, #tpu.memory_space<vmem>>, vector<1x76xf32>
    %c1_28 = arith.constant 1 : index
    %c2_29 = arith.constant 2 : index
    %38 = vector.load %arg4[%c1_28, %c2_29] : memref<20x80xf32, #tpu.memory_space<vmem>>, vector<16x76xf32>
    %39 = vector.broadcast %37 : vector<1x76xf32> to vector<16x76xf32>
    %40 = arith.mulf %39, %38 : vector<16x76xf32>
    %41 = arith.addf %36, %40 : vector<16x76xf32>
    %c8 = arith.constant 8 : index
    %c0_30 = arith.constant 0 : index
    %42 = vector.load %arg2[%c8, %c0_30] : memref<25x76xf32, #tpu.memory_space<vmem>>, vector<1x76xf32>
    %c1_31 = arith.constant 1 : index
    %c3_32 = arith.constant 3 : index
    %43 = vector.load %arg4[%c1_31, %c3_32] : memref<20x80xf32, #tpu.memory_space<vmem>>, vector<16x76xf32>
    %44 = vector.broadcast %42 : vector<1x76xf32> to vector<16x76xf32>
    %45 = arith.mulf %44, %43 : vector<16x76xf32>
    %46 = arith.addf %41, %45 : vector<16x76xf32>
    %c9 = arith.constant 9 : index
    %c0_33 = arith.constant 0 : index
    %47 = vector.load %arg2[%c9, %c0_33] : memref<25x76xf32, #tpu.memory_space<vmem>>, vector<1x76xf32>
    %c1_34 = arith.constant 1 : index
    %c4_35 = arith.constant 4 : index
    %48 = vector.load %arg4[%c1_34, %c4_35] : memref<20x80xf32, #tpu.memory_space<vmem>>, vector<16x76xf32>
    %49 = vector.broadcast %47 : vector<1x76xf32> to vector<16x76xf32>
    %50 = arith.mulf %49, %48 : vector<16x76xf32>
    %51 = arith.addf %46, %50 : vector<16x76xf32>
    %c10 = arith.constant 10 : index
    %c0_36 = arith.constant 0 : index
    %52 = vector.load %arg2[%c10, %c0_36] : memref<25x76xf32, #tpu.memory_space<vmem>>, vector<1x76xf32>
    %c2_37 = arith.constant 2 : index
    %c0_38 = arith.constant 0 : index
    %53 = vector.load %arg4[%c2_37, %c0_38] : memref<20x80xf32, #tpu.memory_space<vmem>>, vector<16x76xf32>
    %54 = vector.broadcast %52 : vector<1x76xf32> to vector<16x76xf32>
    %55 = arith.mulf %54, %53 : vector<16x76xf32>
    %c11 = arith.constant 11 : index
    %c0_39 = arith.constant 0 : index
    %56 = vector.load %arg2[%c11, %c0_39] : memref<25x76xf32, #tpu.memory_space<vmem>>, vector<1x76xf32>
    %c2_40 = arith.constant 2 : index
    %c1_41 = arith.constant 1 : index
    %57 = vector.load %arg4[%c2_40, %c1_41] : memref<20x80xf32, #tpu.memory_space<vmem>>, vector<16x76xf32>
    %58 = vector.broadcast %56 : vector<1x76xf32> to vector<16x76xf32>
    %59 = arith.mulf %58, %57 : vector<16x76xf32>
    %60 = arith.addf %55, %59 : vector<16x76xf32>
    %c12 = arith.constant 12 : index
    %c0_42 = arith.constant 0 : index
    %61 = vector.load %arg2[%c12, %c0_42] : memref<25x76xf32, #tpu.memory_space<vmem>>, vector<1x76xf32>
    %c2_43 = arith.constant 2 : index
    %c2_44 = arith.constant 2 : index
    %62 = vector.load %arg4[%c2_43, %c2_44] : memref<20x80xf32, #tpu.memory_space<vmem>>, vector<16x76xf32>
    %63 = vector.broadcast %61 : vector<1x76xf32> to vector<16x76xf32>
    %64 = arith.mulf %63, %62 : vector<16x76xf32>
    %65 = arith.addf %60, %64 : vector<16x76xf32>
    %c13 = arith.constant 13 : index
    %c0_45 = arith.constant 0 : index
    %66 = vector.load %arg2[%c13, %c0_45] : memref<25x76xf32, #tpu.memory_space<vmem>>, vector<1x76xf32>
    %c2_46 = arith.constant 2 : index
    %c3_47 = arith.constant 3 : index
    %67 = vector.load %arg4[%c2_46, %c3_47] : memref<20x80xf32, #tpu.memory_space<vmem>>, vector<16x76xf32>
    %68 = vector.broadcast %66 : vector<1x76xf32> to vector<16x76xf32>
    %69 = arith.mulf %68, %67 : vector<16x76xf32>
    %70 = arith.addf %65, %69 : vector<16x76xf32>
    %c14 = arith.constant 14 : index
    %c0_48 = arith.constant 0 : index
    %71 = vector.load %arg2[%c14, %c0_48] : memref<25x76xf32, #tpu.memory_space<vmem>>, vector<1x76xf32>
    %c2_49 = arith.constant 2 : index
    %c4_50 = arith.constant 4 : index
    %72 = vector.load %arg4[%c2_49, %c4_50] : memref<20x80xf32, #tpu.memory_space<vmem>>, vector<16x76xf32>
    %73 = vector.broadcast %71 : vector<1x76xf32> to vector<16x76xf32>
    %74 = arith.mulf %73, %72 : vector<16x76xf32>
    %75 = arith.addf %70, %74 : vector<16x76xf32>
    %c15 = arith.constant 15 : index
    %c0_51 = arith.constant 0 : index
    %76 = vector.load %arg2[%c15, %c0_51] : memref<25x76xf32, #tpu.memory_space<vmem>>, vector<1x76xf32>
    %c3_52 = arith.constant 3 : index
    %c0_53 = arith.constant 0 : index
    %77 = vector.load %arg4[%c3_52, %c0_53] : memref<20x80xf32, #tpu.memory_space<vmem>>, vector<16x76xf32>
    %78 = vector.broadcast %76 : vector<1x76xf32> to vector<16x76xf32>
    %79 = arith.mulf %78, %77 : vector<16x76xf32>
    %c16 = arith.constant 16 : index
    %c0_54 = arith.constant 0 : index
    %80 = vector.load %arg2[%c16, %c0_54] : memref<25x76xf32, #tpu.memory_space<vmem>>, vector<1x76xf32>
    %c3_55 = arith.constant 3 : index
    %c1_56 = arith.constant 1 : index
    %81 = vector.load %arg4[%c3_55, %c1_56] : memref<20x80xf32, #tpu.memory_space<vmem>>, vector<16x76xf32>
    %82 = vector.broadcast %80 : vector<1x76xf32> to vector<16x76xf32>
    %83 = arith.mulf %82, %81 : vector<16x76xf32>
    %84 = arith.addf %79, %83 : vector<16x76xf32>
    %c17 = arith.constant 17 : index
    %c0_57 = arith.constant 0 : index
    %85 = vector.load %arg2[%c17, %c0_57] : memref<25x76xf32, #tpu.memory_space<vmem>>, vector<1x76xf32>
    %c3_58 = arith.constant 3 : index
    %c2_59 = arith.constant 2 : index
    %86 = vector.load %arg4[%c3_58, %c2_59] : memref<20x80xf32, #tpu.memory_space<vmem>>, vector<16x76xf32>
    %87 = vector.broadcast %85 : vector<1x76xf32> to vector<16x76xf32>
    %88 = arith.mulf %87, %86 : vector<16x76xf32>
    %89 = arith.addf %84, %88 : vector<16x76xf32>
    %c18 = arith.constant 18 : index
    %c0_60 = arith.constant 0 : index
    %90 = vector.load %arg2[%c18, %c0_60] : memref<25x76xf32, #tpu.memory_space<vmem>>, vector<1x76xf32>
    %c3_61 = arith.constant 3 : index
    %c3_62 = arith.constant 3 : index
    %91 = vector.load %arg4[%c3_61, %c3_62] : memref<20x80xf32, #tpu.memory_space<vmem>>, vector<16x76xf32>
    %92 = vector.broadcast %90 : vector<1x76xf32> to vector<16x76xf32>
    %93 = arith.mulf %92, %91 : vector<16x76xf32>
    %94 = arith.addf %89, %93 : vector<16x76xf32>
    %c19 = arith.constant 19 : index
    %c0_63 = arith.constant 0 : index
    %95 = vector.load %arg2[%c19, %c0_63] : memref<25x76xf32, #tpu.memory_space<vmem>>, vector<1x76xf32>
    %c3_64 = arith.constant 3 : index
    %c4_65 = arith.constant 4 : index
    %96 = vector.load %arg4[%c3_64, %c4_65] : memref<20x80xf32, #tpu.memory_space<vmem>>, vector<16x76xf32>
    %97 = vector.broadcast %95 : vector<1x76xf32> to vector<16x76xf32>
    %98 = arith.mulf %97, %96 : vector<16x76xf32>
    %99 = arith.addf %94, %98 : vector<16x76xf32>
    %c20 = arith.constant 20 : index
    %c0_66 = arith.constant 0 : index
    %100 = vector.load %arg2[%c20, %c0_66] : memref<25x76xf32, #tpu.memory_space<vmem>>, vector<1x76xf32>
    %c4_67 = arith.constant 4 : index
    %c0_68 = arith.constant 0 : index
    %101 = vector.load %arg4[%c4_67, %c0_68] : memref<20x80xf32, #tpu.memory_space<vmem>>, vector<16x76xf32>
    %102 = vector.broadcast %100 : vector<1x76xf32> to vector<16x76xf32>
    %103 = arith.mulf %102, %101 : vector<16x76xf32>
    %c21 = arith.constant 21 : index
    %c0_69 = arith.constant 0 : index
    %104 = vector.load %arg2[%c21, %c0_69] : memref<25x76xf32, #tpu.memory_space<vmem>>, vector<1x76xf32>
    %c4_70 = arith.constant 4 : index
    %c1_71 = arith.constant 1 : index
    %105 = vector.load %arg4[%c4_70, %c1_71] : memref<20x80xf32, #tpu.memory_space<vmem>>, vector<16x76xf32>
    %106 = vector.broadcast %104 : vector<1x76xf32> to vector<16x76xf32>
    %107 = arith.mulf %106, %105 : vector<16x76xf32>
    %108 = arith.addf %103, %107 : vector<16x76xf32>
    %c22 = arith.constant 22 : index
    %c0_72 = arith.constant 0 : index
    %109 = vector.load %arg2[%c22, %c0_72] : memref<25x76xf32, #tpu.memory_space<vmem>>, vector<1x76xf32>
    %c4_73 = arith.constant 4 : index
    %c2_74 = arith.constant 2 : index
    %110 = vector.load %arg4[%c4_73, %c2_74] : memref<20x80xf32, #tpu.memory_space<vmem>>, vector<16x76xf32>
    %111 = vector.broadcast %109 : vector<1x76xf32> to vector<16x76xf32>
    %112 = arith.mulf %111, %110 : vector<16x76xf32>
    %113 = arith.addf %108, %112 : vector<16x76xf32>
    %c23 = arith.constant 23 : index
    %c0_75 = arith.constant 0 : index
    %114 = vector.load %arg2[%c23, %c0_75] : memref<25x76xf32, #tpu.memory_space<vmem>>, vector<1x76xf32>
    %c4_76 = arith.constant 4 : index
    %c3_77 = arith.constant 3 : index
    %115 = vector.load %arg4[%c4_76, %c3_77] : memref<20x80xf32, #tpu.memory_space<vmem>>, vector<16x76xf32>
    %116 = vector.broadcast %114 : vector<1x76xf32> to vector<16x76xf32>
    %117 = arith.mulf %116, %115 : vector<16x76xf32>
    %118 = arith.addf %113, %117 : vector<16x76xf32>
    %c24 = arith.constant 24 : index
    %c0_78 = arith.constant 0 : index
    %119 = vector.load %arg2[%c24, %c0_78] : memref<25x76xf32, #tpu.memory_space<vmem>>, vector<1x76xf32>
    %c4_79 = arith.constant 4 : index
    %c4_80 = arith.constant 4 : index
    %120 = vector.load %arg4[%c4_79, %c4_80] : memref<20x80xf32, #tpu.memory_space<vmem>>, vector<16x76xf32>
    %121 = vector.broadcast %119 : vector<1x76xf32> to vector<16x76xf32>
    %122 = arith.mulf %121, %120 : vector<16x76xf32>
    %123 = arith.addf %118, %122 : vector<16x76xf32>
    %124 = arith.addf %27, %51 : vector<16x76xf32>
    %125 = arith.addf %75, %99 : vector<16x76xf32>
    %126 = arith.addf %124, %125 : vector<16x76xf32>
    %127 = arith.addf %126, %123 : vector<16x76xf32>
    %c0_81 = arith.constant 0 : index
    %c0_82 = arith.constant 0 : index
    %128 = vector.load %arg5[%c0_81, %c0_82] : memref<16x76xf32, #tpu.memory_space<vmem>>, vector<16x76xf32>
    tpu.vector_store %arg5[%c0_81, %c0_82], %127 {strides = array<i32>} : memref<16x76xf32, #tpu.memory_space<vmem>>, vector<16x76xf32>,
    %c0_83 = arith.constant 0 : index
    %c0_84 = arith.constant 0 : index
    %129 = vector.load %arg5[%c0_83, %c0_84] : memref<16x76xf32, #tpu.memory_space<vmem>>, vector<16x16xf32>
    %c0_85 = arith.constant 0 : index
    %c0_86 = arith.constant 0 : index
    %c0_87 = arith.constant 0 : index
    %c0_88 = arith.constant 0 : index
    %130 = vector.load %arg3[%c0_85, %c0_86, %c0_87, %c0_88] : memref<2x2x16x16xf32, #tpu.memory_space<vmem>>, vector<1x1x16x16xf32>
    %131 = vector.shape_cast %130 : vector<1x1x16x16xf32> to vector<16x16xf32>
    %132 = vector.shape_cast %129 : vector<16x16xf32> to vector<1x1x16x16xf32>
    tpu.vector_store %arg3[%c0_85, %c0_86, %c0_87, %c0_88], %132 {strides = array<i32>} : memref<2x2x16x16xf32, #tpu.memory_space<vmem>>, vector<1x1x16x16xf32>,
    %c0_89 = arith.constant 0 : index
    %c20_90 = arith.constant 20 : index
    %133 = vector.load %arg5[%c0_89, %c20_90] : memref<16x76xf32, #tpu.memory_space<vmem>>, vector<16x16xf32>
    %c0_91 = arith.constant 0 : index
    %c1_92 = arith.constant 1 : index
    %c0_93 = arith.constant 0 : index
    %c0_94 = arith.constant 0 : index
    %134 = vector.load %arg3[%c0_91, %c1_92, %c0_93, %c0_94] : memref<2x2x16x16xf32, #tpu.memory_space<vmem>>, vector<1x1x16x16xf32>
    %135 = vector.shape_cast %134 : vector<1x1x16x16xf32> to vector<16x16xf32>
    %136 = vector.shape_cast %133 : vector<16x16xf32> to vector<1x1x16x16xf32>
    tpu.vector_store %arg3[%c0_91, %c1_92, %c0_93, %c0_94], %136 {strides = array<i32>} : memref<2x2x16x16xf32, #tpu.memory_space<vmem>>, vector<1x1x16x16xf32>,
    %c0_95 = arith.constant 0 : index
    %c40 = arith.constant 40 : index
    %137 = vector.load %arg5[%c0_95, %c40] : memref<16x76xf32, #tpu.memory_space<vmem>>, vector<16x16xf32>
    %c1_96 = arith.constant 1 : index
    %c0_97 = arith.constant 0 : index
    %c0_98 = arith.constant 0 : index
    %c0_99 = arith.constant 0 : index
    %138 = vector.load %arg3[%c1_96, %c0_97, %c0_98, %c0_99] : memref<2x2x16x16xf32, #tpu.memory_space<vmem>>, vector<1x1x16x16xf32>
    %139 = vector.shape_cast %138 : vector<1x1x16x16xf32> to vector<16x16xf32>
    %140 = vector.shape_cast %137 : vector<16x16xf32> to vector<1x1x16x16xf32>
    tpu.vector_store %arg3[%c1_96, %c0_97, %c0_98, %c0_99], %140 {strides = array<i32>} : memref<2x2x16x16xf32, #tpu.memory_space<vmem>>, vector<1x1x16x16xf32>,
    %c0_100 = arith.constant 0 : index
    %c60 = arith.constant 60 : index
    %141 = vector.load %arg5[%c0_100, %c60] : memref<16x76xf32, #tpu.memory_space<vmem>>, vector<16x16xf32>
    %c1_101 = arith.constant 1 : index
    %c1_102 = arith.constant 1 : index
    %c0_103 = arith.constant 0 : index
    %c0_104 = arith.constant 0 : index
    %142 = vector.load %arg3[%c1_101, %c1_102, %c0_103, %c0_104] : memref<2x2x16x16xf32, #tpu.memory_space<vmem>>, vector<1x1x16x16xf32>
    %143 = vector.shape_cast %142 : vector<1x1x16x16xf32> to vector<16x16xf32>
    %144 = vector.shape_cast %141 : vector<16x16xf32> to vector<1x1x16x16xf32>
    tpu.vector_store %arg3[%c1_101, %c1_102, %c0_103, %c0_104], %144 {strides = array<i32>} : memref<2x2x16x16xf32, #tpu.memory_space<vmem>>, vector<1x1x16x16xf32>,
    return
  }
}

</mosaic_0001>

<llo_original>
// kernel: tpu_custom_call.1
$region0: #{tpu_custom_call.1}
  #allocation0 [shape = 'u32[]', space=smem, size = 0x4, offset = 0x4, fixed_abs, tag = 'smem constant byte address 0x4 - core index']
  #allocation1 [shape = 'u32[72,128]{1,0:T(1,128)}', space=vmem, size = 0x9000, scoped, tag = 'internal scratch']
  #allocation2 [shape = 'f32[20,80]{1,0:T(8,128)}', space=vmem, size = 0x3000, scoped, tag = 'scratch operand']
  #allocation3 [shape = 'f32[16,76]{1,0:T(8,128)}', space=vmem, size = 0x2000, scoped, tag = 'scratch operand']
  %s0 = inlined_call_operand.hbm [shape: f32[20,80], index: 0, kind: input, shape index: {}]
  %s1 = inlined_call_operand.hbm [shape: f32[20,80], index: 1, kind: input, shape index: {}]
  %s2 = inlined_call_operand.hbm [shape: f32[25,76], index: 2, kind: input, shape index: {}]
  %s3 = inlined_call_operand.hbm [shape: f32[2,2,16,16], index: 3, kind: output, shape index: {}]
  %s4 = sld [smem:[#allocation0]]
  $region34: #{tpu_custom_call.1} parent=0
    _
  %s6 = ssub.s32 1, %s4
  %s7 = scalar_select 0, %s6, %s4
  $region1: #{tpu_custom_call.1} parent=0
    #allocation4 [shape = 'u8[12288]{0}', space=vmem, size = 0x3000, scoped, tag = 'input window, operand 0, single buffered']
    #allocation5 [shape = 's32[1]{0}', space=sflag, size = 0x4, scoped, tag = 'scoped memory for tpu_custom_call.1']
    #allocation6 [shape = 's32[1]{0}', space=sflag, size = 0x4, scoped, tag = 'scoped memory for tpu_custom_call.1']
    #allocation7 [shape = 'u8[12288]{0}', space=vmem, size = 0x3000, scoped, tag = 'input window, operand 1, single buffered']
    #allocation8 [shape = 's32[1]{0}', space=sflag, size = 0x4, scoped, tag = 'scoped memory for tpu_custom_call.1']
    #allocation9 [shape = 'u8[16384]{0}', space=vmem, size = 0x4000, scoped, tag = 'input window, operand 2, single buffered']
    #allocation10 [shape = 'u8[32768]{0}', space=vmem, size = 0x8000, scoped, tag = 'output window, operand 0, single buffered']
    %8 = vsyncpa [#allocation5], 0
    %9 = vsyncpa [#allocation8], 0
    %10 = vsyncpa [#allocation6], 0
    // Predicated region
    $region2: #{tpu_custom_call.1} parent=1 // pred_check
      _
    $region3: #{tpu_custom_call.1} parent=1 // pred_check_branch
      %12 = sbr.rel (0) target = $region5
    $region4: #{tpu_custom_call.1} parent=1 // pred_region
      %14 = vsyncadd [#allocation5], 0
      %s15 = sshll.u32 %s0, 4
      %s16 = int_to_ptr.hbm [resolvable:$true] %s15
      %s17 = sshll.u32 [#allocation4], 4
      %s18 = int_to_ptr.vmem [resolvable:$true] %s17
      %23 = dma.hbm_to_vmem [thread:$0]  %s16, 384, %s18, [#allocation5], 128, 128, 8
    $region5: #{tpu_custom_call.1} parent=1 // pred_fallthru
      _
    // Predicated region
    $region6: #{tpu_custom_call.1} parent=1 // pred_check
      _
    $region7: #{tpu_custom_call.1} parent=1 // pred_check_branch
      %25 = sbr.rel (0) target = $region9
    $region8: #{tpu_custom_call.1} parent=1 // pred_region
      %27 = vsyncadd [#allocation8], 0
      %s28 = sshll.u32 %s1, 4
      %s29 = int_to_ptr.hbm [resolvable:$true] %s28
      %s30 = sshll.u32 [#allocation7], 4
      %s31 = int_to_ptr.vmem [resolvable:$true] %s30
      %36 = dma.hbm_to_vmem [thread:$0]  %s29, 384, %s31, [#allocation8], 128, 128, 8
    $region9: #{tpu_custom_call.1} parent=1 // pred_fallthru
      _
    // Predicated region
    $region10: #{tpu_custom_call.1} parent=1 // pred_check
      _
    $region11: #{tpu_custom_call.1} parent=1 // pred_check_branch
      %38 = sbr.rel (0) target = $region13
    $region12: #{tpu_custom_call.1} parent=1 // pred_region
      %40 = vsyncadd [#allocation8], 0
      %s41 = sshll.u32 %s2, 4
      %s42 = int_to_ptr.hbm [resolvable:$true] %s41
      %s43 = sshll.u32 [#allocation9], 4
      %s44 = int_to_ptr.vmem [resolvable:$true] %s43
      %49 = dma.hbm_to_vmem [thread:$0]  %s42, 512, %s44, [#allocation8], 128, 128, 8
    $region13: #{tpu_custom_call.1} parent=1 // pred_fallthru
      _
    // Predicated region
    $region14: #{tpu_custom_call.1} parent=1 // pred_check
      _
    $region15: #{tpu_custom_call.1} parent=1 // pred_check_branch
      %51 = sbr.rel (0) target = $region17
    $region16: #{tpu_custom_call.1} parent=1 // pred_region
      %53 = dma.done [#allocation5], 384
    $region17: #{tpu_custom_call.1} parent=1 // pred_fallthru
      _
    // Predicated region
    $region18: #{tpu_custom_call.1} parent=1 // pred_check
      _
    $region19: #{tpu_custom_call.1} parent=1 // pred_check_branch
      %55 = sbr.rel (0) target = $region21
    $region20: #{tpu_custom_call.1} parent=1 // pred_region
      %57 = dma.done [#allocation8], 384
    $region21: #{tpu_custom_call.1} parent=1 // pred_fallthru
      _
    // Predicated region
    $region22: #{tpu_custom_call.1} parent=1 // pred_check
      _
    $region23: #{tpu_custom_call.1} parent=1 // pred_check_branch
      %59 = sbr.rel (0) target = $region25
    $region24: #{tpu_custom_call.1} parent=1 // pred_region
      %61 = dma.done [#allocation8], 512
    $region25: #{tpu_custom_call.1} parent=1 // pred_fallthru
      _
    %v62 = vld [vmem:[#allocation4] sm:$0xff]
    %v63 = vld [vmem:[#allocation4 + $0x8] sm:$0xff]
    %v64 = vld [vmem:[#allocation4 + $0x10] sm:$0xf]
    %v65 = vld [vmem:[#allocation7] sm:$0xff]
    %v66 = vld [vmem:[#allocation7 + $0x8] sm:$0xff]
    %v67 = vld [vmem:[#allocation7 + $0x10] sm:$0xf]
    %v68 = vmul.f32 %v62, %v65
    %v69 = vmul.f32 %v63, %v66
    %v70 = vmul.f32 %v64, %v67
    %vm71 = vcmask 654336
    %72 = vst.msk [vmem:[#allocation2] sm:$0xff] %vm71, %v68
    %73 = vst.msk [vmem:[#allocation2 + $0x8] sm:$0xff] %vm71, %v69
    %vm74 = vcmask 650240
    %75 = vst.msk [vmem:[#allocation2 + $0x10] sm:$0xf] %vm74, %v70
    %v76 = vld [vmem:[#allocation9] sm:$0x1]
    %v77 = vld [vmem:[#allocation2] sm:$0xff]
    %v78 = vld [vmem:[#allocation2 + $0x8] sm:$0xff]
    %v79 = vperm.slane %v76, 0
    %v80 = vmul.f32 %v79, %v77
    %v81 = vmul.f32 %v79, %v78
    %v82 = vld [vmem:[#allocation9 + $0x1] sm:$0x1]
    %v83 = vperm.slane %v82, 0
    %86 = vrot.lane.b32.xlu0 %v77, 127
    %v87 = vpop.permute.xlu0 %86
    %88 = vrot.lane.b32.xlu0 %v78, 127
    %v89 = vpop.permute.xlu0 %88
    %v92 = vmul.f32 %v83, %v87
    %v93 = vmul.f32 %v83, %v89
    %v94 = vadd.f32 %v80, %v92
    %v95 = vadd.f32 %v81, %v93
    %v96 = vld [vmem:[#allocation9 + $0x2] sm:$0x1]
    %v97 = vperm.slane %v96, 0
    %98 = vrot.lane.b32.xlu0 %v77, 126
    %v99 = vpop.permute.xlu0 %98
    %100 = vrot.lane.b32.xlu0 %v78, 126
    %v101 = vpop.permute.xlu0 %100
    %v104 = vmul.f32 %v97, %v99
    %v105 = vmul.f32 %v97, %v101
    %v106 = vadd.f32 %v94, %v104
    %v107 = vadd.f32 %v95, %v105
    %v108 = vld [vmem:[#allocation9 + $0x3] sm:$0x1]
    %v109 = vperm.slane %v108, 0
    %110 = vrot.lane.b32.xlu0 %v77, 125
    %v111 = vpop.permute.xlu0 %110
    %112 = vrot.lane.b32.xlu0 %v78, 125
    %v113 = vpop.permute.xlu0 %112
    %v116 = vmul.f32 %v109, %v111
    %v117 = vmul.f32 %v109, %v113
    %v118 = vadd.f32 %v106, %v116
    %v119 = vadd.f32 %v107, %v117
    %v120 = vld [vmem:[#allocation9 + $0x4] sm:$0x1]
    %v121 = vperm.slane %v120, 0
    %122 = vrot.lane.b32.xlu0 %v77, 124
    %v123 = vpop.permute.xlu0 %122
    %124 = vrot.lane.b32.xlu0 %v78, 124
    %v125 = vpop.permute.xlu0 %124
    %v128 = vmul.f32 %v121, %v123
    %v129 = vmul.f32 %v121, %v125
    %v130 = vadd.f32 %v118, %v128
    %v131 = vadd.f32 %v119, %v129
    %v132 = vld [vmem:[#allocation9 + $0x5] sm:$0x1]
    %v133 = vld [vmem:[#allocation2 + $0x1] sm:$0xff]
    %v134 = vld [vmem:[#allocation2 + $0x9] sm:$0xff]
    %v135 = vperm.slane %v132, 0
    %v136 = vmul.f32 %v135, %v133
    %v137 = vmul.f32 %v135, %v134
    %v138 = vld [vmem:[#allocation9 + $0x6] sm:$0x1]
    %v139 = vperm.slane %v138, 0
    %142 = vrot.lane.b32.xlu0 %v133, 127
    %v143 = vpop.permute.xlu0 %142
    %144 = vrot.lane.b32.xlu0 %v134, 127
    %v145 = vpop.permute.xlu0 %144
    %v148 = vmul.f32 %v139, %v143
    %v149 = vmul.f32 %v139, %v145
    %v150 = vadd.f32 %v136, %v148
    %v151 = vadd.f32 %v137, %v149
    %v152 = vld [vmem:[#allocation9 + $0x7] sm:$0x1]
    %v153 = vperm.slane %v152, 0
    %154 = vrot.lane.b32.xlu0 %v133, 126
    %v155 = vpop.permute.xlu0 %154
    %156 = vrot.lane.b32.xlu0 %v134, 126
    %v157 = vpop.permute.xlu0 %156
    %v160 = vmul.f32 %v153, %v155
    %v161 = vmul.f32 %v153, %v157
    %v162 = vadd.f32 %v150, %v160
    %v163 = vadd.f32 %v151, %v161
    %v164 = vld [vmem:[#allocation9 + $0x8] sm:$0x1]
    %v165 = vperm.slane %v164, 0
    %166 = vrot.lane.b32.xlu0 %v133, 125
    %v167 = vpop.permute.xlu0 %166
    %168 = vrot.lane.b32.xlu0 %v134, 125
    %v169 = vpop.permute.xlu0 %168
    %v172 = vmul.f32 %v165, %v167
    %v173 = vmul.f32 %v165, %v169
    %v174 = vadd.f32 %v162, %v172
    %v175 = vadd.f32 %v163, %v173
    %v176 = vld [vmem:[#allocation9 + $0x9] sm:$0x1]
    %v177 = vperm.slane %v176, 0
    %178 = vrot.lane.b32.xlu0 %v133, 124
    %v179 = vpop.permute.xlu0 %178
    %180 = vrot.lane.b32.xlu0 %v134, 124
    %v181 = vpop.permute.xlu0 %180
    %v184 = vmul.f32 %v177, %v179
    %v185 = vmul.f32 %v177, %v181
    %v186 = vadd.f32 %v174, %v184
    %v187 = vadd.f32 %v175, %v185
    %v188 = vld [vmem:[#allocation9 + $0xa] sm:$0x1]
    %v189 = vld [vmem:[#allocation2 + $0x2] sm:$0xff]
    %v190 = vld [vmem:[#allocation2 + $0xa] sm:$0xff]
    %v191 = vperm.slane %v188, 0
    %v192 = vmul.f32 %v191, %v189
    %v193 = vmul.f32 %v191, %v190
    %v194 = vld [vmem:[#allocation9 + $0xb] sm:$0x1]
    %v195 = vperm.slane %v194, 0
    %198 = vrot.lane.b32.xlu0 %v189, 127
    %v199 = vpop.permute.xlu0 %198
    %200 = vrot.lane.b32.xlu0 %v190, 127
    %v201 = vpop.permute.xlu0 %200
    %v204 = vmul.f32 %v195, %v199
    %v205 = vmul.f32 %v195, %v201
    %v206 = vadd.f32 %v192, %v204
    %v207 = vadd.f32 %v193, %v205
    %v208 = vld [vmem:[#allocation9 + $0xc] sm:$0x1]
    %v209 = vperm.slane %v208, 0
    %210 = vrot.lane.b32.xlu0 %v189, 126
    %v211 = vpop.permute.xlu0 %210
    %212 = vrot.lane.b32.xlu0 %v190, 126
    %v213 = vpop.permute.xlu0 %212
    %v216 = vmul.f32 %v209, %v211
    %v217 = vmul.f32 %v209, %v213
    %v218 = vadd.f32 %v206, %v216
    %v219 = vadd.f32 %v207, %v217
    %v220 = vld [vmem:[#allocation9 + $0xd] sm:$0x1]
    %v221 = vperm.slane %v220, 0
    %222 = vrot.lane.b32.xlu0 %v189, 125
    %v223 = vpop.permute.xlu0 %222
    %224 = vrot.lane.b32.xlu0 %v190, 125
    %v225 = vpop.permute.xlu0 %224
    %v228 = vmul.f32 %v221, %v223
    %v229 = vmul.f32 %v221, %v225
    %v230 = vadd.f32 %v218, %v228
    %v231 = vadd.f32 %v219, %v229
    %v232 = vld [vmem:[#allocation9 + $0xe] sm:$0x1]
    %v233 = vperm.slane %v232, 0
    %234 = vrot.lane.b32.xlu0 %v189, 124
    %v235 = vpop.permute.xlu0 %234
    %236 = vrot.lane.b32.xlu0 %v190, 124
    %v237 = vpop.permute.xlu0 %236
    %v240 = vmul.f32 %v233, %v235
    %v241 = vmul.f32 %v233, %v237
    %v242 = vadd.f32 %v230, %v240
    %v243 = vadd.f32 %v231, %v241
    %v244 = vld [vmem:[#allocation9 + $0xf] sm:$0x1]
    %v245 = vld [vmem:[#allocation2 + $0x3] sm:$0xff]
    %v246 = vld [vmem:[#allocation2 + $0xb] sm:$0xff]
    %v247 = vperm.slane %v244, 0
    %v248 = vmul.f32 %v247, %v245
    %v249 = vmul.f32 %v247, %v246
    %v250 = vld [vmem:[#allocation9 + $0x10] sm:$0x1]
    %v251 = vperm.slane %v250, 0
    %254 = vrot.lane.b32.xlu0 %v245, 127
    %v255 = vpop.permute.xlu0 %254
    %256 = vrot.lane.b32.xlu0 %v246, 127
    %v257 = vpop.permute.xlu0 %256
    %v260 = vmul.f32 %v251, %v255
    %v261 = vmul.f32 %v251, %v257
    %v262 = vadd.f32 %v248, %v260
    %v263 = vadd.f32 %v249, %v261
    %v264 = vld [vmem:[#allocation9 + $0x11] sm:$0x1]
    %v265 = vperm.slane %v264, 0
    %266 = vrot.lane.b32.xlu0 %v245, 126
    %v267 = vpop.permute.xlu0 %266
    %268 = vrot.lane.b32.xlu0 %v246, 126
    %v269 = vpop.permute.xlu0 %268
    %v272 = vmul.f32 %v265, %v267
    %v273 = vmul.f32 %v265, %v269
    %v274 = vadd.f32 %v262, %v272
    %v275 = vadd.f32 %v263, %v273
    %v276 = vld [vmem:[#allocation9 + $0x12] sm:$0x1]
    %v277 = vperm.slane %v276, 0
    %278 = vrot.lane.b32.xlu0 %v245, 125
    %v279 = vpop.permute.xlu0 %278
    %280 = vrot.lane.b32.xlu0 %v246, 125
    %v281 = vpop.permute.xlu0 %280
    %v284 = vmul.f32 %v277, %v279
    %v285 = vmul.f32 %v277, %v281
    %v286 = vadd.f32 %v274, %v284
    %v287 = vadd.f32 %v275, %v285
    %v288 = vld [vmem:[#allocation9 + $0x13] sm:$0x1]
    %v289 = vperm.slane %v288, 0
    %290 = vrot.lane.b32.xlu0 %v245, 124
    %v291 = vpop.permute.xlu0 %290
    %292 = vrot.lane.b32.xlu0 %v246, 124
    %v293 = vpop.permute.xlu0 %292
    %v296 = vmul.f32 %v289, %v291
    %v297 = vmul.f32 %v289, %v293
    %v298 = vadd.f32 %v286, %v296
    %v299 = vadd.f32 %v287, %v297
    %v300 = vld [vmem:[#allocation9 + $0x14] sm:$0x1]
    %v301 = vld [vmem:[#allocation2 + $0x4] sm:$0xff]
    %v302 = vld [vmem:[#allocation2 + $0xc] sm:$0xff]
    %v303 = vperm.slane %v300, 0
    %v304 = vmul.f32 %v303, %v301
    %v305 = vmul.f32 %v303, %v302
    %v306 = vld [vmem:[#allocation9 + $0x15] sm:$0x1]
    %v307 = vperm.slane %v306, 0
    %310 = vrot.lane.b32.xlu0 %v301, 127
    %v311 = vpop.permute.xlu0 %310
    %312 = vrot.lane.b32.xlu0 %v302, 127
    %v313 = vpop.permute.xlu0 %312
    %v316 = vmul.f32 %v307, %v311
    %v317 = vmul.f32 %v307, %v313
    %v318 = vadd.f32 %v304, %v316
    %v319 = vadd.f32 %v305, %v317
    %v320 = vld [vmem:[#allocation9 + $0x16] sm:$0x1]
    %v321 = vperm.slane %v320, 0
    %322 = vrot.lane.b32.xlu0 %v301, 126
    %v323 = vpop.permute.xlu0 %322
    %324 = vrot.lane.b32.xlu0 %v302, 126
    %v325 = vpop.permute.xlu0 %324
    %v328 = vmul.f32 %v321, %v323
    %v329 = vmul.f32 %v321, %v325
    %v330 = vadd.f32 %v318, %v328
    %v331 = vadd.f32 %v319, %v329
    %v332 = vld [vmem:[#allocation9 + $0x17] sm:$0x1]
    %v333 = vperm.slane %v332, 0
    %334 = vrot.lane.b32.xlu0 %v301, 125
    %v335 = vpop.permute.xlu0 %334
    %336 = vrot.lane.b32.xlu0 %v302, 125
    %v337 = vpop.permute.xlu0 %336
    %v340 = vmul.f32 %v333, %v335
    %v341 = vmul.f32 %v333, %v337
    %v342 = vadd.f32 %v330, %v340
    %v343 = vadd.f32 %v331, %v341
    %v344 = vld [vmem:[#allocation9 + $0x18] sm:$0x1]
    %v345 = vperm.slane %v344, 0
    %346 = vrot.lane.b32.xlu0 %v301, 124
    %v347 = vpop.permute.xlu0 %346
    %348 = vrot.lane.b32.xlu0 %v302, 124
    %v349 = vpop.permute.xlu0 %348
    %v352 = vmul.f32 %v345, %v347
    %v353 = vmul.f32 %v345, %v349
    %v354 = vadd.f32 %v342, %v352
    %v355 = vadd.f32 %v343, %v353
    %v356 = vadd.f32 %v130, %v186
    %v357 = vadd.f32 %v131, %v187
    %v358 = vadd.f32 %v242, %v298
    %v359 = vadd.f32 %v243, %v299
    %v360 = vadd.f32 %v356, %v358
    %v361 = vadd.f32 %v357, %v359
    %v362 = vadd.f32 %v360, %v354
    %v363 = vadd.f32 %v361, %v355
    %vm364 = vcmask 621568
    %365 = vst.msk [vmem:[#allocation3] sm:$0xff] %vm364, %v362
    %366 = vst.msk [vmem:[#allocation3 + $0x8] sm:$0xff] %vm364, %v363
    %v367 = vld [vmem:[#allocation3] sm:$0xff]
    %v368 = vld [vmem:[#allocation3 + $0x8] sm:$0xff]
    %vm369 = vcmask 130048
    %370 = vst.msk [vmem:[#allocation10] sm:$0xff] %vm369, %v367
    %371 = vst.msk [vmem:[#allocation10 + $0x8] sm:$0xff] %vm369, %v368
    %v372 = vld [vmem:[#allocation3] sm:$0xff]
    %v373 = vld [vmem:[#allocation3 + $0x8] sm:$0xff]
    %376 = vrot.lane.b32.xlu0 %v372, 108
    %v377 = vpop.permute.xlu0 %376
    %378 = vrot.lane.b32.xlu0 %v373, 108
    %v379 = vpop.permute.xlu0 %378
    %s382 = scalar_lea.vmem [#allocation10], 16
    %383 = vst.msk [vmem:[%s382] sm:$0xff] %vm369, %v377
    %384 = vst.msk [vmem:[%s382 + $0x8] sm:$0xff] %vm369, %v379
    %v385 = vld [vmem:[#allocation3] sm:$0xff]
    %v386 = vld [vmem:[#allocation3 + $0x8] sm:$0xff]
    %389 = vrot.lane.b32.xlu0 %v385, 88
    %v390 = vpop.permute.xlu0 %389
    %391 = vrot.lane.b32.xlu0 %v386, 88
    %v392 = vpop.permute.xlu0 %391
    %s395 = scalar_lea.vmem [#allocation10], 32
    %396 = vst.msk [vmem:[%s395] sm:$0xff] %vm369, %v390
    %397 = vst.msk [vmem:[%s395 + $0x8] sm:$0xff] %vm369, %v392
    %v398 = vld [vmem:[#allocation3] sm:$0xff]
    %v399 = vld [vmem:[#allocation3 + $0x8] sm:$0xff]
    %402 = vrot.lane.b32.xlu0 %v398, 68
    %v403 = vpop.permute.xlu0 %402
    %404 = vrot.lane.b32.xlu0 %v399, 68
    %v405 = vpop.permute.xlu0 %404
    %s408 = scalar_lea.vmem [#allocation10], 48
    %409 = vst.msk [vmem:[%s408] sm:$0xff] %vm369, %v403
    %410 = vst.msk [vmem:[%s408 + $0x8] sm:$0xff] %vm369, %v405
    // Predicated region
    $region26: #{tpu_custom_call.1} parent=1 // pred_check
      _
    $region27: #{tpu_custom_call.1} parent=1 // pred_check_branch
      %412 = sbr.rel (0) target = $region29
    $region28: #{tpu_custom_call.1} parent=1 // pred_region
      %414 = vsyncadd [#allocation6], 0
      %s415 = sshll.u32 [#allocation10], 4
      %s416 = int_to_ptr.vmem [resolvable:$true] %s415
      %s417 = sshll.u32 %s3, 4
      %s418 = int_to_ptr.hbm [resolvable:$true] %s417
      %423 = dma.vmem_to_hbm [thread:$0]  %s416, 1024, %s418, [#allocation6], 128, 128, 8
    $region29: #{tpu_custom_call.1} parent=1 // pred_fallthru
      _
    // Predicated region
    $region30: #{tpu_custom_call.1} parent=1 // pred_check
      _
    $region31: #{tpu_custom_call.1} parent=1 // pred_check_branch
      %425 = sbr.rel (0) target = $region33
    $region32: #{tpu_custom_call.1} parent=1 // pred_region
      %427 = dma.done [#allocation6], 1024
    $region33: #{tpu_custom_call.1} parent=1 // pred_fallthru
      _
    %428 = vsyncpa [#allocation5], 1
    %429 = vsyncpa [#allocation8], 1
    %430 = vsyncpa [#allocation6], 1

</llo_original>
